<compile_context>
chip_gen: v5e
topology: v5e:2x2
jax: 0.10.0
libtpu: 0.0.40
codegen_flags: <defaults>
</compile_context>

<pallas_src>
import functools

import jax
import jax.numpy as jnp
from jax.experimental import pallas as pl
from jax.experimental.pallas import tpu as pltpu


def _soft_embed_kernel(soft_hbm, emb_hbm, out_hbm, sems, *, soft_rows, emb_rows):
    """One grid step = one batch row b.  Pure data movement, all HBM -> HBM:
         out[b, 0:soft_rows, :]                      <- soft_weight[0:soft_rows, :]
         out[b, soft_rows:soft_rows+emb_rows, :]     <- embedding[b, 0:emb_rows, :]
    Both copies are started before either is waited so they overlap on the DMA
    engine; the output never round-trips through VMEM."""
    b = pl.program_id(0)

    # Small copy: soft-prompt rows (broadcast over batch by re-reading per step).
    soft_cp = pltpu.make_async_copy(
        soft_hbm.at[pl.ds(0, soft_rows), :],
        out_hbm.at[b, pl.ds(0, soft_rows), :],
        sems.at[0],
    )
    soft_cp.start()

    if emb_rows > 0:  # static: skip entirely when seq_length <= n_tokens
        # Big copy: one fully contiguous HBM -> HBM transfer per batch.  The
        # [:, :seq_length] slice of the concat means embedding rows past
        # seq_length - n_tokens are simply never read.
        emb_cp = pltpu.make_async_copy(
            emb_hbm.at[b, pl.ds(0, emb_rows), :],
            out_hbm.at[b, pl.ds(soft_rows, emb_rows), :],
            sems.at[1],
        )
        emb_cp.start()
        emb_cp.wait()

    soft_cp.wait()


def soft_embedding_concat(embedding, soft_weight, seq_length):
    """out = concat([soft_weight broadcast over batch, embedding], axis=1)[:, :seq_length]."""
    B, S, H = embedding.shape
    n_tokens, Hw = soft_weight.shape
    if Hw != H:
        raise ValueError("hidden size mismatch between soft prompt and embedding")
    if n_tokens < 1:
        raise ValueError("need n_tokens >= 1")

    soft_rows = min(n_tokens, seq_length)        # soft rows that survive [:seq_length]
    emb_rows = max(seq_length - n_tokens, 0)     # embedding rows that survive it
    if emb_rows > S:
        raise ValueError("seq_length - n_tokens must not exceed the embedding length")

    itemsize = jnp.dtype(embedding.dtype).itemsize
    # Pure-bandwidth kernel: reads (soft_rows + emb_rows) * H per batch,
    # writes seq_length * H per batch.
    cost = pl.CostEstimate(
        flops=0,
        transcendentals=0,
        bytes_accessed=int(itemsize) * B * (seq_length + soft_rows + emb_rows) * H,
    )

    kernel = functools.partial(
        _soft_embed_kernel, soft_rows=soft_rows, emb_rows=emb_rows
    )

    return pl.pallas_call(
        kernel,
        out_shape=jax.ShapeDtypeStruct((B, seq_length, H), embedding.dtype),
        grid_spec=pltpu.PrefetchScalarGridSpec(
            num_scalar_prefetch=0,
            grid=(B,),
            in_specs=[
                pl.BlockSpec(memory_space=pl.ANY),   # soft prompt weight (HBM)
                pl.BlockSpec(memory_space=pl.ANY),   # embedding (HBM)
            ],
            out_specs=pl.BlockSpec(memory_space=pl.ANY),  # output (HBM, DMA'd directly)
            scratch_shapes=[pltpu.SemaphoreType.DMA((2,))],
        ),
        compiler_params=pltpu.CompilerParams(
            dimension_semantics=("parallel",),   # batch rows are independent -> megacore split
        ),
        cost_estimate=cost,
    )(soft_weight.astype(embedding.dtype), embedding)


def soft_embedding_forward(args, soft_weight, seq_length):
    """Mirrors SoftEmbedding.forward. Mask / layer_past are passed through outside the kernel."""
    if len(args) == 2:  # train path
        embedding, attention_mask = args
        out = soft_embedding_concat(embedding, soft_weight, seq_length)
        return (out, attention_mask)
    elif len(args) == 3:  # inference path
        embedding, layer_past, attention_mask = args
        if layer_past is None or layer_past.size == 0:
            embedding = soft_embedding_concat(embedding, soft_weight, seq_length)
        return (embedding, layer_past, attention_mask)
    else:
        raise ValueError("args must be (embedding, mask) or (embedding, layer_past, mask)")


def _reference(embedding, soft_weight, seq_length):
    B = embedding.shape[0]
    soft = jnp.broadcast_to(
        soft_weight.astype(embedding.dtype)[None], (B,) + soft_weight.shape
    )
    return jnp.concatenate([soft, embedding], axis=1)[:, :seq_length]


if __name__ == "__main__":
    key = jax.random.PRNGKey(0)
    k_emb, k_soft, k_emb2, k_soft2 = jax.random.split(key, 4)

    # 1) Train path, float32, seq_length == S (typical Megatron path).
    B, S, H = 2, 64, 128
    n_tokens = 10          # matches the module default (deliberately not a multiple of 8)
    seq_length = 64

    embedding = jax.random.normal(k_emb, (B, S, H), dtype=jnp.float32)
    soft_weight = jax.random.uniform(
        k_soft, (n_tokens, H), dtype=jnp.float32, minval=-0.5, maxval=0.5
    )
    attention_mask = jnp.ones((B, 1, seq_length, seq_length), dtype=jnp.bool_)

    ref = _reference(embedding, soft_weight, seq_length)
    out, mask_out = soft_embedding_forward((embedding, attention_mask), soft_weight, seq_length)
    out = jax.block_until_ready(out)
    assert out.shape == (B, seq_length, H)
    assert bool(jnp.array_equal(out, ref))
    assert mask_out is attention_mask

    # 2) Odd batch, bfloat16, seq_length < S (exercises the [:seq_length] truncation
    #    and the packed-dtype HBM->HBM path; odd B is the small-batch megacore case).
    B2, S2, H2, seq2 = 3, 64, 256, 48
    emb2 = jax.random.normal(k_emb2, (B2, S2, H2), dtype=jnp.bfloat16)
    soft2 = jax.random.uniform(
        k_soft2, (n_tokens, H2), dtype=jnp.bfloat16, minval=-0.5, maxval=0.5
    )
    mask2 = jnp.ones((B2, 1, seq2, seq2), dtype=jnp.bool_)
    ref2 = _reference(emb2, soft2, seq2)
    out2, _ = soft_embedding_forward((emb2, mask2), soft2, seq2)
    out2 = jax.block_until_ready(out2)
    assert out2.shape == (B2, seq2, H2)
    assert bool(jnp.array_equal(out2, ref2))

    # 3) Inference path: empty layer_past applies the concat; non-empty bypasses it.
    empty_past = jnp.zeros((0,), dtype=jnp.float32)
    out_inf, past_out, _ = soft_embedding_forward(
        (embedding, empty_past, attention_mask), soft_weight, seq_length
    )
    out_inf = jax.block_until_ready(out_inf)
    assert bool(jnp.array_equal(out_inf, ref))

    nonempty_past = jnp.zeros((1, 2, 4), dtype=jnp.float32)
    out_skip, _, _ = soft_embedding_forward(
        (embedding, nonempty_past, attention_mask), soft_weight, seq_length
    )
    assert out_skip is embedding  # passthrough, no kernel call

    # TODO(synk): soft_embedding_weight initialization from init_string (tokenizer +
    # wte lookup) is host-side parameter init, not part of the forward pass; not ported.

    print("KERNEL_OK")
</pallas_src>

<mosaic_0001>
module attributes {stable_mosaic.version = 11 : i64} {
  func.func @_soft_embed_kernel(%arg0: i32, %arg1: memref<10x128xf32, #tpu.memory_space<any>>, %arg2: memref<2x64x128xf32, #tpu.memory_space<any>>, %arg3: memref<2x64x128xf32, #tpu.memory_space<any>>, %arg4: memref<2x!tpu.dma_semaphore, #tpu.memory_space<semaphore_mem>>) attributes {dimension_semantics = [#tpu.dimension_semantics<parallel>], iteration_bounds = array<i64: 2>, scalar_prefetch = 0 : i64, scratch_operands = 1 : i64, tpu.core_type = #tpu.core_type<tc>, window_params = [{}, {}, {}]} {
    %c0_i32 = arith.constant 0 : i32
    %c0_i32_0 = arith.constant 0 : i32
    %c0_i32_1 = arith.constant 0 : i32
    %0 = tpu.memref_slice %arg1[%c0_i32_0, %c0_i32_1] : memref<10x128xf32, #tpu.memory_space<any>> -> memref<10x128xf32, #tpu.memory_space<any>>
    %c0_i32_2 = arith.constant 0 : i32
    %c0_i32_3 = arith.constant 0 : i32
    %1 = tpu.memref_slice %arg3[%arg0, %c0_i32_2, %c0_i32_3] : memref<2x64x128xf32, #tpu.memory_space<any>> -> memref<1x10x128xf32, #tpu.memory_space<any>>
    %2 = tpu.memref_squeeze %1 : memref<1x10x128xf32, #tpu.memory_space<any>> -> memref<10x128xf32, #tpu.memory_space<any>>
    %3 = tpu.memref_slice %arg4[%c0_i32] : memref<2x!tpu.dma_semaphore, #tpu.memory_space<semaphore_mem>> -> memref<1x!tpu.dma_semaphore, #tpu.memory_space<semaphore_mem>>
    %4 = tpu.memref_squeeze %3 : memref<1x!tpu.dma_semaphore, #tpu.memory_space<semaphore_mem>> -> memref<!tpu.dma_semaphore, #tpu.memory_space<semaphore_mem>>
    tpu.enqueue_dma source(%0 : memref<10x128xf32, #tpu.memory_space<any>>) target(%2 : memref<10x128xf32, #tpu.memory_space<any>>) target_semaphore(%4 : memref<!tpu.dma_semaphore, #tpu.memory_space<semaphore_mem>>)
    %c1_i32 = arith.constant 1 : i32
    %c0_i32_4 = arith.constant 0 : i32
    %c0_i32_5 = arith.constant 0 : i32
    %5 = tpu.memref_slice %arg2[%arg0, %c0_i32_4, %c0_i32_5] : memref<2x64x128xf32, #tpu.memory_space<any>> -> memref<1x54x128xf32, #tpu.memory_space<any>>
    %6 = tpu.memref_squeeze %5 : memref<1x54x128xf32, #tpu.memory_space<any>> -> memref<54x128xf32, #tpu.memory_space<any>>
    %c10_i32 = arith.constant 10 : i32
    %c0_i32_6 = arith.constant 0 : i32
    %7 = tpu.memref_slice %arg3[%arg0, %c10_i32, %c0_i32_6] : memref<2x64x128xf32, #tpu.memory_space<any>> -> memref<1x54x128xf32, #tpu.memory_space<any>>
    %8 = tpu.memref_squeeze %7 : memref<1x54x128xf32, #tpu.memory_space<any>> -> memref<54x128xf32, #tpu.memory_space<any>>
    %9 = tpu.memref_slice %arg4[%c1_i32] : memref<2x!tpu.dma_semaphore, #tpu.memory_space<semaphore_mem>> -> memref<1x!tpu.dma_semaphore, #tpu.memory_space<semaphore_mem>>
    %10 = tpu.memref_squeeze %9 : memref<1x!tpu.dma_semaphore, #tpu.memory_space<semaphore_mem>> -> memref<!tpu.dma_semaphore, #tpu.memory_space<semaphore_mem>>
    tpu.enqueue_dma source(%6 : memref<54x128xf32, #tpu.memory_space<any>>) target(%8 : memref<54x128xf32, #tpu.memory_space<any>>) target_semaphore(%10 : memref<!tpu.dma_semaphore, #tpu.memory_space<semaphore_mem>>)
    %c1_i32_7 = arith.constant 1 : i32
    %c0_i32_8 = arith.constant 0 : i32
    %c0_i32_9 = arith.constant 0 : i32
    %11 = tpu.memref_slice %arg2[%arg0, %c0_i32_8, %c0_i32_9] : memref<2x64x128xf32, #tpu.memory_space<any>> -> memref<1x54x128xf32, #tpu.memory_space<any>>
    %12 = tpu.memref_squeeze %11 : memref<1x54x128xf32, #tpu.memory_space<any>> -> memref<54x128xf32, #tpu.memory_space<any>>
    %c10_i32_10 = arith.constant 10 : i32
    %c0_i32_11 = arith.constant 0 : i32
    %13 = tpu.memref_slice %arg3[%arg0, %c10_i32_10, %c0_i32_11] : memref<2x64x128xf32, #tpu.memory_space<any>> -> memref<1x54x128xf32, #tpu.memory_space<any>>
    %14 = tpu.memref_squeeze %13 : memref<1x54x128xf32, #tpu.memory_space<any>> -> memref<54x128xf32, #tpu.memory_space<any>>
    %15 = tpu.memref_slice %arg4[%c1_i32_7] : memref<2x!tpu.dma_semaphore, #tpu.memory_space<semaphore_mem>> -> memref<1x!tpu.dma_semaphore, #tpu.memory_space<semaphore_mem>>
    %16 = tpu.memref_squeeze %15 : memref<1x!tpu.dma_semaphore, #tpu.memory_space<semaphore_mem>> -> memref<!tpu.dma_semaphore, #tpu.memory_space<semaphore_mem>>
    tpu.wait_dma2 semaphore(%16 : memref<!tpu.dma_semaphore, #tpu.memory_space<semaphore_mem>>) src(%12 : memref<54x128xf32, #tpu.memory_space<any>>) dst(%14 : memref<54x128xf32, #tpu.memory_space<any>>)
    %c0_i32_12 = arith.constant 0 : i32
    %c0_i32_13 = arith.constant 0 : i32
    %c0_i32_14 = arith.constant 0 : i32
    %17 = tpu.memref_slice %arg1[%c0_i32_13, %c0_i32_14] : memref<10x128xf32, #tpu.memory_space<any>> -> memref<10x128xf32, #tpu.memory_space<any>>
    %c0_i32_15 = arith.constant 0 : i32
    %c0_i32_16 = arith.constant 0 : i32
    %18 = tpu.memref_slice %arg3[%arg0, %c0_i32_15, %c0_i32_16] : memref<2x64x128xf32, #tpu.memory_space<any>> -> memref<1x10x128xf32, #tpu.memory_space<any>>
    %19 = tpu.memref_squeeze %18 : memref<1x10x128xf32, #tpu.memory_space<any>> -> memref<10x128xf32, #tpu.memory_space<any>>
    %20 = tpu.memref_slice %arg4[%c0_i32_12] : memref<2x!tpu.dma_semaphore, #tpu.memory_space<semaphore_mem>> -> memref<1x!tpu.dma_semaphore, #tpu.memory_space<semaphore_mem>>
    %21 = tpu.memref_squeeze %20 : memref<1x!tpu.dma_semaphore, #tpu.memory_space<semaphore_mem>> -> memref<!tpu.dma_semaphore, #tpu.memory_space<semaphore_mem>>
    tpu.wait_dma2 semaphore(%21 : memref<!tpu.dma_semaphore, #tpu.memory_space<semaphore_mem>>) src(%17 : memref<10x128xf32, #tpu.memory_space<any>>) dst(%19 : memref<10x128xf32, #tpu.memory_space<any>>)
    return
  }
}

</mosaic_0001>

<llo_original>
// kernel: tpu_custom_call.1
$region0: #{tpu_custom_call.1}
  #allocation0 [shape = 'u32[]', space=smem, size = 0x4, offset = 0x4, fixed_abs, tag = 'smem constant byte address 0x4 - core index']
  #allocation1 [shape = 'u32[72,128]{1,0:T(1,128)}', space=vmem, size = 0x9000, scoped, tag = 'internal scratch']
  #allocation2 [shape = 's32[2]{0}', space=sflag, size = 0x8, scoped, tag = 'scratch operand']
  #allocation3 [shape = 's32[]', space=sflag, size = 0x4, offset = 0, fixed_abs, tag = 'sflag constant byte address 0x0 - dummy sync flag']
  #allocation4 [shape = 'u32[0]{0}', space=smem, size = 0, offset = 0, fixed_abs, tag = 'smem constant byte address 0x0 - null']
  #allocation5 [shape = 's32[]', space=sflag, size = 0x4, offset = 0, fixed_abs, tag = 'sflag constant byte address 0x0 - dummy sync flag']
  #allocation6 [shape = 'u32[0]{0}', space=smem, size = 0, offset = 0, fixed_abs, tag = 'smem constant byte address 0x0 - null']
  %s0 = inlined_call_operand.hbm [shape: f32[10,128], index: 0, kind: input, shape index: {}]
  %s1 = inlined_call_operand.hbm [shape: f32[2,64,128], index: 1, kind: input, shape index: {}]
  %s2 = inlined_call_operand.hbm [shape: f32[2,64,128], index: 2, kind: output, shape index: {}]
  %s3 = sld [smem:[#allocation0]]
  $region9: #{tpu_custom_call.1} parent=0
    _
  %s5 = ssub.s32 1, %s3
  %s6 = scalar_select 0, %s5, %s3
  loop: start=0, step=1, limit=2
  $region2: #{tpu_custom_call.1} parent=0 // loop_pre_header
    _
  $region3: #{tpu_custom_call.1} parent=0 // loop_header
    %s8 = sphi 0, %s12
    %p9 = scmp.ge.s32.totalorder %s8, 2
  $region4: #{tpu_custom_call.1} parent=0 // loop_header_branch
    %11 = sbr.rel (%p9) target = $region8
  $region5: #{tpu_custom_call.1} parent=0 // loop_body
    %s13 = sadd.s32 %s8, 1
    %s14 = smul.u32 %s8, 64
    %s15 = scalar_lea.hbm %s2, %s14
    %s17 = sshll.u32 1, 14
    %s18 = sxor.u32 4294967295, %s17
    %s20 = sshll.u32 %s0, 4
    %s21 = int_to_ptr.hbm [resolvable:$true] %s20
    %s22 = sshll.u32 %s15, 4
    %s23 = int_to_ptr.hbm [resolvable:$true] %s22
    %26 = dma.general %s21, 160, %s23, [#allocation2], [#allocation3], [#allocation4], 0, 0
    %s27 = scalar_lea.hbm %s1, %s14
    %s28 = sadd.s32 10, %s14
    %s29 = scalar_lea.hbm %s2, %s28
    %s30 = scalar_lea.sflag [#allocation2], 1
    %s32 = sshll.u32 1, 14
    %s33 = sxor.u32 4294967295, %s32
    %s35 = sshll.u32 %s27, 4
    %s36 = int_to_ptr.hbm [resolvable:$true] %s35
    %s37 = sshll.u32 %s29, 4
    %s38 = int_to_ptr.hbm [resolvable:$true] %s37
    %41 = dma.general %s36, 864, %s38, %s30, [#allocation5], [#allocation6], 0, 0
    %s42 = smul.u32 54, 1
    %s43 = sshll.u32 %s42, 4
    %44 = dma.done %s30, %s43
    %s45 = smul.u32 10, 1
    %s46 = sshll.u32 %s45, 4
    %47 = dma.done [#allocation2], %s46
  $region6: #{tpu_custom_call.1} parent=0 // loop_footer
    %s12 = sadd.s32 1, %s8
  $region7: #{tpu_custom_call.1} parent=0 // loop_footer_branch
    %7 = sbr.rel target = $region3
  $region8: #{tpu_custom_call.1} parent=0 // loop_exit
    _
  %48 = vsyncmov [#allocation2]
  %s49 = vpop.sfrf %48
  %p50 = scmp.eq.s32.totalorder %s49, 0
  %p51 = pneg %p50
  %53 = shalt.err (%p51)
  %s54 = scalar_lea.sflag [#allocation2], 1
  %55 = vsyncmov %s54
  %s56 = vpop.sfrf %55
  %p57 = scmp.eq.s32.totalorder %s56, 0
  %p58 = pneg %p57
  %60 = shalt.err (%p58)

</llo_original>
